<compile_context>
chip_gen: v7x
topology: tpu7x:2x2x1
jax: 0.10.0
libtpu: 0.0.40
codegen_flags: <defaults>
</compile_context>

<pallas_src>
import jax
import jax.numpy as jnp
from jax import lax
from jax.experimental import pallas as pl
from jax.experimental.pallas import tpu as pltpu


def _lstm1_kernel(x_ref, wih_ref, whh_ref, b_ref, h_out_ref, xg_ref):
    TB, D = x_ref.shape            # time-major flattened: row = t * B + b
    B, H = h_out_ref.shape
    T = TB // B
    G = 4 * H

    # ---- Pre-pass: input projection for ALL time steps in one matmul. ----
    xg_ref[...] = (
        jnp.dot(x_ref[...], wih_ref[...], preferred_element_type=jnp.float32)
        + b_ref[...]
    )                              # (T*B, 4H), bias folded in once

    whh = whh_ref[...]             # (H, 4H), loaded once, loop-invariant

    # Lane mask selecting the g-gate block [2H, 3H) of the 4H gate vector
    # (hoisted out of the loop; JAX does not CSE broadcasts).
    lane = lax.broadcasted_iota(jnp.int32, (B, G), 1)
    g_mask = (lane >= 2 * H) & (lane < 3 * H)

    def step(t, carry):
        h, c = carry
        gates = xg_ref[pl.ds(t * B, B), :] + jnp.dot(
            h, whh, preferred_element_type=jnp.float32)      # (B, 4H)
        # Full-vreg activations + one select instead of 4 H-wide slices.
        sig = jax.nn.sigmoid(gates)
        th = jnp.tanh(gates)
        act = jnp.where(g_mask, th, sig)
        i_g = act[:, 0:H]
        f_g = act[:, H:2 * H]
        g_g = act[:, 2 * H:3 * H]
        o_g = act[:, 3 * H:4 * H]
        c = f_g * c + i_g * g_g
        h = o_g * jnp.tanh(c)
        return h, c

    h0 = jnp.zeros((B, H), jnp.float32)
    c0 = jnp.zeros((B, H), jnp.float32)
    h_fin, _ = lax.fori_loop(0, T, step, (h0, c0), unroll=True)
    h_out_ref[...] = h_fin


def _lstm_final_hidden(x_flat, wih_t, whh_t, b, *, B_pad, H):
    """Single-invocation pallas_call returning the final hidden state."""
    TB = x_flat.shape[0]
    vmem = lambda: pl.BlockSpec(memory_space=pltpu.MemorySpace.VMEM)
    return pl.pallas_call(
        _lstm1_kernel,
        out_shape=jax.ShapeDtypeStruct((B_pad, H), jnp.float32),
        in_specs=[vmem(), vmem(), vmem(), vmem()],
        out_specs=vmem(),
        scratch_shapes=[pltpu.VMEM((TB, 4 * H), jnp.float32)],
    )(x_flat, wih_t, whh_t, b)


@jax.jit
def lstm1_forward(x, params):
    """x: (B, T, D) float32, batch_first.  Returns (B, num_classes) f32."""
    B, T, D = x.shape
    H = params["whh_t"].shape[0]

    # Pad batch to a multiple of 8 sublanes (full vregs / MXU rows); padded
    # rows are independent garbage and are sliced off below.
    B_pad = ((B + 7) // 8) * 8
    x_p = jnp.pad(x, ((0, B_pad - B), (0, 0), (0, 0)))
    # Time-major, flattened: row t*B_pad + b  ==  (time step t, batch b).
    x_flat = jnp.transpose(x_p, (1, 0, 2)).reshape(T * B_pad, D)

    h_fin = _lstm_final_hidden(
        x_flat, params["wih_t"], params["whh_t"], params["b"],
        B_pad=B_pad, H=H)[:B]

    # FC head hoisted to plain XLA (cheaper than a lane-sparse (B, C) kernel
    # store): relu(hn) -> fc_1 -> relu -> fc.
    out = jnp.maximum(h_fin, 0.0)
    out = jnp.maximum(out @ params["w1_t"] + params["b1"], 0.0)
    return out @ params["w2_t"] + params["b2"]


def init_params(key, input_size, hidden_size, num_classes):
    """Deterministic synthetic parameters (PyTorch-style uniform init)."""
    ks = jax.random.split(key, 8)
    H, D, C = hidden_size, input_size, num_classes
    s_lstm = 1.0 / jnp.sqrt(H)
    s_fc1 = 1.0 / jnp.sqrt(H)
    s_fc2 = 1.0 / jnp.sqrt(128.0)
    u = lambda k, shape, s: jax.random.uniform(k, shape, jnp.float32, -s, s)

    w_ih = u(ks[0], (4 * H, D), s_lstm)        # PyTorch layout (4H, D)
    w_hh = u(ks[1], (4 * H, H), s_lstm)        # (4H, H)
    b_ih = u(ks[2], (4 * H,), s_lstm)
    b_hh = u(ks[3], (4 * H,), s_lstm)
    w1 = u(ks[4], (128, H), s_fc1)             # fc_1: Linear(H, 128)
    b1 = u(ks[5], (128,), s_fc1)
    w2 = u(ks[6], (C, 128), s_fc2)             # fc: Linear(128, C)
    b2 = u(ks[7], (C,), s_fc2)

    return {
        "wih_t": w_ih.T,                       # (D, 4H)
        "whh_t": w_hh.T,                       # (H, 4H)
        "b": (b_ih + b_hh)[None, :],           # (1, 4H)
        "w1_t": w1.T,                          # (H, 128)
        "b1": b1[None, :],                     # (1, 128)
        "w2_t": w2.T,                          # (128, C)
        "b2": b2[None, :],                     # (1, C)
    }


def lstm1_reference(x, params):
    """Pure-JAX reference (mirrors PyTorch semantics) for validation."""
    B, T, D = x.shape
    H = params["whh_t"].shape[0]

    def step(carry, x_t):
        h, c = carry
        gates = x_t @ params["wih_t"] + h @ params["whh_t"] + params["b"]
        i = jax.nn.sigmoid(gates[:, 0:H])
        f = jax.nn.sigmoid(gates[:, H:2 * H])
        g = jnp.tanh(gates[:, 2 * H:3 * H])
        o = jax.nn.sigmoid(gates[:, 3 * H:4 * H])
        c = f * c + i * g
        h = o * jnp.tanh(c)
        return (h, c), None

    h0 = jnp.zeros((B, H), jnp.float32)
    (h, _), _ = lax.scan(step, (h0, h0), jnp.swapaxes(x, 0, 1))
    out = jnp.maximum(h, 0.0)
    out = jnp.maximum(out @ params["w1_t"] + params["b1"], 0.0)
    return out @ params["w2_t"] + params["b2"]


if __name__ == "__main__":
    # Small shapes consistent with the module's forward:
    batch = 2
    input_size = 8
    hidden_size = 32
    num_classes = 4
    seq_length = 8

    key = jax.random.PRNGKey(0)
    k_x, k_p = jax.random.split(key)
    x = jax.random.normal(k_x, (batch, seq_length, input_size), jnp.float32)
    params = init_params(k_p, input_size, hidden_size, num_classes)

    out = lstm1_forward(x, params)
    out = jax.block_until_ready(out)

    ref = lstm1_reference(x, params)
    assert out.shape == (batch, num_classes)
    assert jnp.allclose(out, ref, atol=1e-5, rtol=1e-5), (out, ref)

    print("KERNEL_OK")
</pallas_src>

<mosaic_0001>
module attributes {stable_mosaic.version = 11 : i64} {
  func.func @_lstm1_kernel(%arg0: memref<64x8xf32, #tpu.memory_space<vmem>>, %arg1: memref<8x128xf32, #tpu.memory_space<vmem>>, %arg2: memref<32x128xf32, #tpu.memory_space<vmem>>, %arg3: memref<1x128xf32, #tpu.memory_space<vmem>>, %arg4: memref<8x32xf32, #tpu.memory_space<vmem>>, %arg5: memref<64x128xf32, #tpu.memory_space<vmem>>) attributes {dimension_semantics = [], scalar_prefetch = 0 : i64, scratch_operands = 1 : i64, tpu.core_type = #tpu.core_type<tc>} {
    %c0 = arith.constant 0 : index
    %c0_0 = arith.constant 0 : index
    %0 = vector.load %arg0[%c0, %c0_0] : memref<64x8xf32, #tpu.memory_space<vmem>>, vector<64x8xf32>
    %c0_1 = arith.constant 0 : index
    %c0_2 = arith.constant 0 : index
    %1 = vector.load %arg1[%c0_1, %c0_2] : memref<8x128xf32, #tpu.memory_space<vmem>>, vector<8x128xf32>
    %cst = arith.constant dense<0.000000e+00> : vector<64x128xf32>
    %2 = tpu.matmul %0, %1, %cst {dimension_numbers = #tpu.dot_dimension_numbers<[1], [0], [0], [1], [0, 0, 1, 1], [], []>} : vector<64x8xf32>, vector<8x128xf32>, vector<64x128xf32> -> vector<64x128xf32>
    %c0_3 = arith.constant 0 : index
    %c0_4 = arith.constant 0 : index
    %3 = vector.load %arg3[%c0_3, %c0_4] : memref<1x128xf32, #tpu.memory_space<vmem>>, vector<1x128xf32>
    %4 = vector.broadcast %3 : vector<1x128xf32> to vector<64x128xf32>
    %5 = arith.addf %2, %4 : vector<64x128xf32>
    %c0_5 = arith.constant 0 : index
    %c0_6 = arith.constant 0 : index
    %6 = vector.load %arg5[%c0_5, %c0_6] : memref<64x128xf32, #tpu.memory_space<vmem>>, vector<64x128xf32>
    tpu.vector_store %arg5[%c0_5, %c0_6], %5 {strides = array<i32>} : memref<64x128xf32, #tpu.memory_space<vmem>>, vector<64x128xf32>,
    %c0_7 = arith.constant 0 : index
    %c0_8 = arith.constant 0 : index
    %7 = vector.load %arg2[%c0_7, %c0_8] : memref<32x128xf32, #tpu.memory_space<vmem>>, vector<32x128xf32>
    %8 = tpu.iota {dimensions = array<i32: 1>} : vector<8x128xi32>
    %c64_i32 = arith.constant 64 : i32
    %9 = vector.broadcast %c64_i32 : i32 to vector<8x128xi32>
    %10 = arith.cmpi sge, %8, %9 : vector<8x128xi32>
    %c96_i32 = arith.constant 96 : i32
    %11 = vector.broadcast %c96_i32 : i32 to vector<8x128xi32>
    %12 = arith.cmpi slt, %8, %11 : vector<8x128xi32>
    %13 = arith.andi %10, %12 : vector<8x128xi1>
    %cst_9 = arith.constant 0.000000e+00 : f32
    %14 = vector.broadcast %cst_9 : f32 to vector<8x32xf32>
    %cst_10 = arith.constant 0.000000e+00 : f32
    %15 = vector.broadcast %cst_10 : f32 to vector<8x32xf32>
    %c0_i32 = arith.constant 0 : i32
    %c8_i32 = arith.constant 8 : i32
    %16 = arith.muli %c0_i32, %c8_i32 : i32
    %17 = arith.index_cast %16 : i32 to index
    %c0_11 = arith.constant 0 : index
    %18 = vector.load %arg5[%17, %c0_11] : memref<64x128xf32, #tpu.memory_space<vmem>>, vector<8x128xf32>
    %cst_12 = arith.constant dense<0.000000e+00> : vector<8x128xf32>
    %19 = tpu.matmul %14, %7, %cst_12 {dimension_numbers = #tpu.dot_dimension_numbers<[1], [0], [0], [1], [0, 0, 1, 1], [], []>} : vector<8x32xf32>, vector<32x128xf32>, vector<8x128xf32> -> vector<8x128xf32>
    %20 = arith.addf %18, %19 : vector<8x128xf32>
    %21 = arith.negf %20 : vector<8x128xf32>
    %22 = math.exp %21 : vector<8x128xf32>
    %cst_13 = arith.constant 1.000000e+00 : f32
    %23 = vector.broadcast %cst_13 : f32 to vector<8x128xf32>
    %24 = arith.addf %23, %22 : vector<8x128xf32>
    %25 = arith.divf %23, %24 : vector<8x128xf32>
    %26 = math.tanh %20 : vector<8x128xf32>
    %27 = arith.select %13, %26, %25 : vector<8x128xi1>, vector<8x128xf32>
    %28 = vector.extract_strided_slice %27 {offsets = [0, 0], sizes = [8, 32], strides = [1, 1]} : vector<8x128xf32> to vector<8x32xf32>
    %29 = vector.extract_strided_slice %27 {offsets = [0, 32], sizes = [8, 32], strides = [1, 1]} : vector<8x128xf32> to vector<8x32xf32>
    %30 = vector.extract_strided_slice %27 {offsets = [0, 64], sizes = [8, 32], strides = [1, 1]} : vector<8x128xf32> to vector<8x32xf32>
    %31 = vector.extract_strided_slice %27 {offsets = [0, 96], sizes = [8, 32], strides = [1, 1]} : vector<8x128xf32> to vector<8x32xf32>
    %32 = arith.mulf %29, %15 : vector<8x32xf32>
    %33 = arith.mulf %28, %30 : vector<8x32xf32>
    %34 = arith.addf %32, %33 : vector<8x32xf32>
    %35 = math.tanh %34 : vector<8x32xf32>
    %36 = arith.mulf %31, %35 : vector<8x32xf32>
    %c1_i32 = arith.constant 1 : i32
    %c8_i32_14 = arith.constant 8 : i32
    %37 = arith.muli %c1_i32, %c8_i32_14 : i32
    %38 = arith.index_cast %37 : i32 to index
    %c0_15 = arith.constant 0 : index
    %39 = vector.load %arg5[%38, %c0_15] : memref<64x128xf32, #tpu.memory_space<vmem>>, vector<8x128xf32>
    %cst_16 = arith.constant dense<0.000000e+00> : vector<8x128xf32>
    %40 = tpu.matmul %36, %7, %cst_16 {dimension_numbers = #tpu.dot_dimension_numbers<[1], [0], [0], [1], [0, 0, 1, 1], [], []>} : vector<8x32xf32>, vector<32x128xf32>, vector<8x128xf32> -> vector<8x128xf32>
    %41 = arith.addf %39, %40 : vector<8x128xf32>
    %42 = arith.negf %41 : vector<8x128xf32>
    %43 = math.exp %42 : vector<8x128xf32>
    %cst_17 = arith.constant 1.000000e+00 : f32
    %44 = vector.broadcast %cst_17 : f32 to vector<8x128xf32>
    %45 = arith.addf %44, %43 : vector<8x128xf32>
    %46 = arith.divf %44, %45 : vector<8x128xf32>
    %47 = math.tanh %41 : vector<8x128xf32>
    %48 = arith.select %13, %47, %46 : vector<8x128xi1>, vector<8x128xf32>
    %49 = vector.extract_strided_slice %48 {offsets = [0, 0], sizes = [8, 32], strides = [1, 1]} : vector<8x128xf32> to vector<8x32xf32>
    %50 = vector.extract_strided_slice %48 {offsets = [0, 32], sizes = [8, 32], strides = [1, 1]} : vector<8x128xf32> to vector<8x32xf32>
    %51 = vector.extract_strided_slice %48 {offsets = [0, 64], sizes = [8, 32], strides = [1, 1]} : vector<8x128xf32> to vector<8x32xf32>
    %52 = vector.extract_strided_slice %48 {offsets = [0, 96], sizes = [8, 32], strides = [1, 1]} : vector<8x128xf32> to vector<8x32xf32>
    %53 = arith.mulf %50, %34 : vector<8x32xf32>
    %54 = arith.mulf %49, %51 : vector<8x32xf32>
    %55 = arith.addf %53, %54 : vector<8x32xf32>
    %56 = math.tanh %55 : vector<8x32xf32>
    %57 = arith.mulf %52, %56 : vector<8x32xf32>
    %c2_i32 = arith.constant 2 : i32
    %c8_i32_18 = arith.constant 8 : i32
    %58 = arith.muli %c2_i32, %c8_i32_18 : i32
    %59 = arith.index_cast %58 : i32 to index
    %c0_19 = arith.constant 0 : index
    %60 = vector.load %arg5[%59, %c0_19] : memref<64x128xf32, #tpu.memory_space<vmem>>, vector<8x128xf32>
    %cst_20 = arith.constant dense<0.000000e+00> : vector<8x128xf32>
    %61 = tpu.matmul %57, %7, %cst_20 {dimension_numbers = #tpu.dot_dimension_numbers<[1], [0], [0], [1], [0, 0, 1, 1], [], []>} : vector<8x32xf32>, vector<32x128xf32>, vector<8x128xf32> -> vector<8x128xf32>
    %62 = arith.addf %60, %61 : vector<8x128xf32>
    %63 = arith.negf %62 : vector<8x128xf32>
    %64 = math.exp %63 : vector<8x128xf32>
    %cst_21 = arith.constant 1.000000e+00 : f32
    %65 = vector.broadcast %cst_21 : f32 to vector<8x128xf32>
    %66 = arith.addf %65, %64 : vector<8x128xf32>
    %67 = arith.divf %65, %66 : vector<8x128xf32>
    %68 = math.tanh %62 : vector<8x128xf32>
    %69 = arith.select %13, %68, %67 : vector<8x128xi1>, vector<8x128xf32>
    %70 = vector.extract_strided_slice %69 {offsets = [0, 0], sizes = [8, 32], strides = [1, 1]} : vector<8x128xf32> to vector<8x32xf32>
    %71 = vector.extract_strided_slice %69 {offsets = [0, 32], sizes = [8, 32], strides = [1, 1]} : vector<8x128xf32> to vector<8x32xf32>
    %72 = vector.extract_strided_slice %69 {offsets = [0, 64], sizes = [8, 32], strides = [1, 1]} : vector<8x128xf32> to vector<8x32xf32>
    %73 = vector.extract_strided_slice %69 {offsets = [0, 96], sizes = [8, 32], strides = [1, 1]} : vector<8x128xf32> to vector<8x32xf32>
    %74 = arith.mulf %71, %55 : vector<8x32xf32>
    %75 = arith.mulf %70, %72 : vector<8x32xf32>
    %76 = arith.addf %74, %75 : vector<8x32xf32>
    %77 = math.tanh %76 : vector<8x32xf32>
    %78 = arith.mulf %73, %77 : vector<8x32xf32>
    %c3_i32 = arith.constant 3 : i32
    %c8_i32_22 = arith.constant 8 : i32
    %79 = arith.muli %c3_i32, %c8_i32_22 : i32
    %80 = arith.index_cast %79 : i32 to index
    %c0_23 = arith.constant 0 : index
    %81 = vector.load %arg5[%80, %c0_23] : memref<64x128xf32, #tpu.memory_space<vmem>>, vector<8x128xf32>
    %cst_24 = arith.constant dense<0.000000e+00> : vector<8x128xf32>
    %82 = tpu.matmul %78, %7, %cst_24 {dimension_numbers = #tpu.dot_dimension_numbers<[1], [0], [0], [1], [0, 0, 1, 1], [], []>} : vector<8x32xf32>, vector<32x128xf32>, vector<8x128xf32> -> vector<8x128xf32>
    %83 = arith.addf %81, %82 : vector<8x128xf32>
    %84 = arith.negf %83 : vector<8x128xf32>
    %85 = math.exp %84 : vector<8x128xf32>
    %cst_25 = arith.constant 1.000000e+00 : f32
    %86 = vector.broadcast %cst_25 : f32 to vector<8x128xf32>
    %87 = arith.addf %86, %85 : vector<8x128xf32>
    %88 = arith.divf %86, %87 : vector<8x128xf32>
    %89 = math.tanh %83 : vector<8x128xf32>
    %90 = arith.select %13, %89, %88 : vector<8x128xi1>, vector<8x128xf32>
    %91 = vector.extract_strided_slice %90 {offsets = [0, 0], sizes = [8, 32], strides = [1, 1]} : vector<8x128xf32> to vector<8x32xf32>
    %92 = vector.extract_strided_slice %90 {offsets = [0, 32], sizes = [8, 32], strides = [1, 1]} : vector<8x128xf32> to vector<8x32xf32>
    %93 = vector.extract_strided_slice %90 {offsets = [0, 64], sizes = [8, 32], strides = [1, 1]} : vector<8x128xf32> to vector<8x32xf32>
    %94 = vector.extract_strided_slice %90 {offsets = [0, 96], sizes = [8, 32], strides = [1, 1]} : vector<8x128xf32> to vector<8x32xf32>
    %95 = arith.mulf %92, %76 : vector<8x32xf32>
    %96 = arith.mulf %91, %93 : vector<8x32xf32>
    %97 = arith.addf %95, %96 : vector<8x32xf32>
    %98 = math.tanh %97 : vector<8x32xf32>
    %99 = arith.mulf %94, %98 : vector<8x32xf32>
    %c4_i32 = arith.constant 4 : i32
    %c8_i32_26 = arith.constant 8 : i32
    %100 = arith.muli %c4_i32, %c8_i32_26 : i32
    %101 = arith.index_cast %100 : i32 to index
    %c0_27 = arith.constant 0 : index
    %102 = vector.load %arg5[%101, %c0_27] : memref<64x128xf32, #tpu.memory_space<vmem>>, vector<8x128xf32>
    %cst_28 = arith.constant dense<0.000000e+00> : vector<8x128xf32>
    %103 = tpu.matmul %99, %7, %cst_28 {dimension_numbers = #tpu.dot_dimension_numbers<[1], [0], [0], [1], [0, 0, 1, 1], [], []>} : vector<8x32xf32>, vector<32x128xf32>, vector<8x128xf32> -> vector<8x128xf32>
    %104 = arith.addf %102, %103 : vector<8x128xf32>
    %105 = arith.negf %104 : vector<8x128xf32>
    %106 = math.exp %105 : vector<8x128xf32>
    %cst_29 = arith.constant 1.000000e+00 : f32
    %107 = vector.broadcast %cst_29 : f32 to vector<8x128xf32>
    %108 = arith.addf %107, %106 : vector<8x128xf32>
    %109 = arith.divf %107, %108 : vector<8x128xf32>
    %110 = math.tanh %104 : vector<8x128xf32>
    %111 = arith.select %13, %110, %109 : vector<8x128xi1>, vector<8x128xf32>
    %112 = vector.extract_strided_slice %111 {offsets = [0, 0], sizes = [8, 32], strides = [1, 1]} : vector<8x128xf32> to vector<8x32xf32>
    %113 = vector.extract_strided_slice %111 {offsets = [0, 32], sizes = [8, 32], strides = [1, 1]} : vector<8x128xf32> to vector<8x32xf32>
    %114 = vector.extract_strided_slice %111 {offsets = [0, 64], sizes = [8, 32], strides = [1, 1]} : vector<8x128xf32> to vector<8x32xf32>
    %115 = vector.extract_strided_slice %111 {offsets = [0, 96], sizes = [8, 32], strides = [1, 1]} : vector<8x128xf32> to vector<8x32xf32>
    %116 = arith.mulf %113, %97 : vector<8x32xf32>
    %117 = arith.mulf %112, %114 : vector<8x32xf32>
    %118 = arith.addf %116, %117 : vector<8x32xf32>
    %119 = math.tanh %118 : vector<8x32xf32>
    %120 = arith.mulf %115, %119 : vector<8x32xf32>
    %c5_i32 = arith.constant 5 : i32
    %c8_i32_30 = arith.constant 8 : i32
    %121 = arith.muli %c5_i32, %c8_i32_30 : i32
    %122 = arith.index_cast %121 : i32 to index
    %c0_31 = arith.constant 0 : index
    %123 = vector.load %arg5[%122, %c0_31] : memref<64x128xf32, #tpu.memory_space<vmem>>, vector<8x128xf32>
    %cst_32 = arith.constant dense<0.000000e+00> : vector<8x128xf32>
    %124 = tpu.matmul %120, %7, %cst_32 {dimension_numbers = #tpu.dot_dimension_numbers<[1], [0], [0], [1], [0, 0, 1, 1], [], []>} : vector<8x32xf32>, vector<32x128xf32>, vector<8x128xf32> -> vector<8x128xf32>
    %125 = arith.addf %123, %124 : vector<8x128xf32>
    %126 = arith.negf %125 : vector<8x128xf32>
    %127 = math.exp %126 : vector<8x128xf32>
    %cst_33 = arith.constant 1.000000e+00 : f32
    %128 = vector.broadcast %cst_33 : f32 to vector<8x128xf32>
    %129 = arith.addf %128, %127 : vector<8x128xf32>
    %130 = arith.divf %128, %129 : vector<8x128xf32>
    %131 = math.tanh %125 : vector<8x128xf32>
    %132 = arith.select %13, %131, %130 : vector<8x128xi1>, vector<8x128xf32>
    %133 = vector.extract_strided_slice %132 {offsets = [0, 0], sizes = [8, 32], strides = [1, 1]} : vector<8x128xf32> to vector<8x32xf32>
    %134 = vector.extract_strided_slice %132 {offsets = [0, 32], sizes = [8, 32], strides = [1, 1]} : vector<8x128xf32> to vector<8x32xf32>
    %135 = vector.extract_strided_slice %132 {offsets = [0, 64], sizes = [8, 32], strides = [1, 1]} : vector<8x128xf32> to vector<8x32xf32>
    %136 = vector.extract_strided_slice %132 {offsets = [0, 96], sizes = [8, 32], strides = [1, 1]} : vector<8x128xf32> to vector<8x32xf32>
    %137 = arith.mulf %134, %118 : vector<8x32xf32>
    %138 = arith.mulf %133, %135 : vector<8x32xf32>
    %139 = arith.addf %137, %138 : vector<8x32xf32>
    %140 = math.tanh %139 : vector<8x32xf32>
    %141 = arith.mulf %136, %140 : vector<8x32xf32>
    %c6_i32 = arith.constant 6 : i32
    %c8_i32_34 = arith.constant 8 : i32
    %142 = arith.muli %c6_i32, %c8_i32_34 : i32
    %143 = arith.index_cast %142 : i32 to index
    %c0_35 = arith.constant 0 : index
    %144 = vector.load %arg5[%143, %c0_35] : memref<64x128xf32, #tpu.memory_space<vmem>>, vector<8x128xf32>
    %cst_36 = arith.constant dense<0.000000e+00> : vector<8x128xf32>
    %145 = tpu.matmul %141, %7, %cst_36 {dimension_numbers = #tpu.dot_dimension_numbers<[1], [0], [0], [1], [0, 0, 1, 1], [], []>} : vector<8x32xf32>, vector<32x128xf32>, vector<8x128xf32> -> vector<8x128xf32>
    %146 = arith.addf %144, %145 : vector<8x128xf32>
    %147 = arith.negf %146 : vector<8x128xf32>
    %148 = math.exp %147 : vector<8x128xf32>
    %cst_37 = arith.constant 1.000000e+00 : f32
    %149 = vector.broadcast %cst_37 : f32 to vector<8x128xf32>
    %150 = arith.addf %149, %148 : vector<8x128xf32>
    %151 = arith.divf %149, %150 : vector<8x128xf32>
    %152 = math.tanh %146 : vector<8x128xf32>
    %153 = arith.select %13, %152, %151 : vector<8x128xi1>, vector<8x128xf32>
    %154 = vector.extract_strided_slice %153 {offsets = [0, 0], sizes = [8, 32], strides = [1, 1]} : vector<8x128xf32> to vector<8x32xf32>
    %155 = vector.extract_strided_slice %153 {offsets = [0, 32], sizes = [8, 32], strides = [1, 1]} : vector<8x128xf32> to vector<8x32xf32>
    %156 = vector.extract_strided_slice %153 {offsets = [0, 64], sizes = [8, 32], strides = [1, 1]} : vector<8x128xf32> to vector<8x32xf32>
    %157 = vector.extract_strided_slice %153 {offsets = [0, 96], sizes = [8, 32], strides = [1, 1]} : vector<8x128xf32> to vector<8x32xf32>
    %158 = arith.mulf %155, %139 : vector<8x32xf32>
    %159 = arith.mulf %154, %156 : vector<8x32xf32>
    %160 = arith.addf %158, %159 : vector<8x32xf32>
    %161 = math.tanh %160 : vector<8x32xf32>
    %162 = arith.mulf %157, %161 : vector<8x32xf32>
    %c7_i32 = arith.constant 7 : i32
    %c8_i32_38 = arith.constant 8 : i32
    %163 = arith.muli %c7_i32, %c8_i32_38 : i32
    %164 = arith.index_cast %163 : i32 to index
    %c0_39 = arith.constant 0 : index
    %165 = vector.load %arg5[%164, %c0_39] : memref<64x128xf32, #tpu.memory_space<vmem>>, vector<8x128xf32>
    %cst_40 = arith.constant dense<0.000000e+00> : vector<8x128xf32>
    %166 = tpu.matmul %162, %7, %cst_40 {dimension_numbers = #tpu.dot_dimension_numbers<[1], [0], [0], [1], [0, 0, 1, 1], [], []>} : vector<8x32xf32>, vector<32x128xf32>, vector<8x128xf32> -> vector<8x128xf32>
    %167 = arith.addf %165, %166 : vector<8x128xf32>
    %168 = arith.negf %167 : vector<8x128xf32>
    %169 = math.exp %168 : vector<8x128xf32>
    %cst_41 = arith.constant 1.000000e+00 : f32
    %170 = vector.broadcast %cst_41 : f32 to vector<8x128xf32>
    %171 = arith.addf %170, %169 : vector<8x128xf32>
    %172 = arith.divf %170, %171 : vector<8x128xf32>
    %173 = math.tanh %167 : vector<8x128xf32>
    %174 = arith.select %13, %173, %172 : vector<8x128xi1>, vector<8x128xf32>
    %175 = vector.extract_strided_slice %174 {offsets = [0, 0], sizes = [8, 32], strides = [1, 1]} : vector<8x128xf32> to vector<8x32xf32>
    %176 = vector.extract_strided_slice %174 {offsets = [0, 32], sizes = [8, 32], strides = [1, 1]} : vector<8x128xf32> to vector<8x32xf32>
    %177 = vector.extract_strided_slice %174 {offsets = [0, 64], sizes = [8, 32], strides = [1, 1]} : vector<8x128xf32> to vector<8x32xf32>
    %178 = vector.extract_strided_slice %174 {offsets = [0, 96], sizes = [8, 32], strides = [1, 1]} : vector<8x128xf32> to vector<8x32xf32>
    %179 = arith.mulf %176, %160 : vector<8x32xf32>
    %180 = arith.mulf %175, %177 : vector<8x32xf32>
    %181 = arith.addf %179, %180 : vector<8x32xf32>
    %182 = math.tanh %181 : vector<8x32xf32>
    %183 = arith.mulf %178, %182 : vector<8x32xf32>
    %c8_i32_42 = arith.constant 8 : i32
    %c0_43 = arith.constant 0 : index
    %c0_44 = arith.constant 0 : index
    %184 = vector.load %arg4[%c0_43, %c0_44] : memref<8x32xf32, #tpu.memory_space<vmem>>, vector<8x32xf32>
    tpu.vector_store %arg4[%c0_43, %c0_44], %183 {strides = array<i32>} : memref<8x32xf32, #tpu.memory_space<vmem>>, vector<8x32xf32>,
    return
  }
}

</mosaic_0001>

<llo_original>
// kernel: lstm1_forward.1
$region0: #{lstm1_forward.1}
  #allocation0 [shape = 'u32[]', space=smem, size = 0x4, offset = 0x4, fixed_abs, tag = 'smem constant byte address 0x4 - core index']
  #allocation1 [shape = 'u32[144,128]{1,0:T(1,128)}', space=vmem, size = 0x12000, scoped, tag = 'internal scratch']
  #allocation2 [shape = 'f32[64,128]{1,0:T(8,128)}', space=vmem, size = 0x8000, scoped, tag = 'scratch operand']
  %s0 = inlined_call_operand.vmem [shape: f32[64,8], index: 0, kind: input, shape index: {}]
  %s1 = inlined_call_operand.vmem [shape: f32[8,128], index: 1, kind: input, shape index: {}]
  %s2 = inlined_call_operand.vmem [shape: f32[32,128], index: 2, kind: input, shape index: {}]
  %s3 = inlined_call_operand.vmem [shape: f32[1,128], index: 3, kind: input, shape index: {}]
  %s4 = inlined_call_operand.vmem [shape: f32[8,32], index: 4, kind: output, shape index: {}]
  %s5 = sld [smem:[#allocation0]]
  $region26: #{lstm1_forward.1} parent=0
    _
  %s7 = ssub.s32 1, %s5
  %s8 = scalar_select 0, %s7, %s5
  // Predicated region
  $region2: #{lstm1_forward.1} parent=0 // pred_check
    _
  $region3: #{lstm1_forward.1} parent=0 // pred_check_branch
    %10 = sbr.rel (0) target = $region5
  $region4: #{lstm1_forward.1} parent=0 // pred_region
    _
  $region5: #{lstm1_forward.1} parent=0 // pred_fallthru
    _
  // Predicated region
  $region6: #{lstm1_forward.1} parent=0 // pred_check
    _
  $region7: #{lstm1_forward.1} parent=0 // pred_check_branch
    %12 = sbr.rel (0) target = $region9
  $region8: #{lstm1_forward.1} parent=0 // pred_region
    _
  $region9: #{lstm1_forward.1} parent=0 // pred_fallthru
    _
  // Predicated region
  $region10: #{lstm1_forward.1} parent=0 // pred_check
    _
  $region11: #{lstm1_forward.1} parent=0 // pred_check_branch
    %14 = sbr.rel (0) target = $region13
  $region12: #{lstm1_forward.1} parent=0 // pred_region
    _
  $region13: #{lstm1_forward.1} parent=0 // pred_fallthru
    _
  // Predicated region
  $region14: #{lstm1_forward.1} parent=0 // pred_check
    _
  $region15: #{lstm1_forward.1} parent=0 // pred_check_branch
    %16 = sbr.rel (0) target = $region17
  $region16: #{lstm1_forward.1} parent=0 // pred_region
    _
  $region17: #{lstm1_forward.1} parent=0 // pred_fallthru
    _
  %v17 = vld [vmem:[%s0] sm:$0xff]
  %v18 = vld [vmem:[%s0 + $0x8] sm:$0xff]
  %v19 = vld [vmem:[%s0 + $0x10] sm:$0xff]
  %v20 = vld [vmem:[%s0 + $0x18] sm:$0xff]
  %v21 = vld [vmem:[%s0 + $0x20] sm:$0xff]
  %v22 = vld [vmem:[%s0 + $0x28] sm:$0xff]
  %v23 = vld [vmem:[%s0 + $0x30] sm:$0xff]
  %v24 = vld [vmem:[%s0 + $0x38] sm:$0xff]
  %v25 = vld [vmem:[%s1] sm:$0xff]
  %v26 = vld [vmem:[%s3] sm:$0x1]
  %v28 = vlaneseq
  %v29 = vshrl.u32 %v28, 7
  %v30 = vsub.s32 0, %v29
  %v31 = vrot.slane %v26, %v30
  %vm33 = vcmask 64512
  %v35 = vsel %vm33, %v17, 0
  %v38 = vsel %vm33, %v18, 0
  %v41 = vsel %vm33, %v19, 0
  %v44 = vsel %vm33, %v20, 0
  %v47 = vsel %vm33, %v21, 0
  %v50 = vsel %vm33, %v22, 0
  %v53 = vsel %vm33, %v23, 0
  %v56 = vsel %vm33, %v24, 0
  %58 = vmatprep.subr.mxu0 0.0
  %59 = vmatpush1.msra.mxu0 %v25
  %60 = vmatprep.subr.mxu0 0.0
  %61 = vmatpush1.msra.mxu0 0.0
  %62 = vmatprep.subr.mxu0 0.0
  %63 = vmatpush1.msra.mxu0 0.0
  %64 = vmatprep.subr.mxu0 0.0
  %65 = vmatpush1.msra.mxu0 0.0
  %66 = vmatprep.subr.mxu0 0.0
  %67 = vmatpush1.msra.mxu0 0.0
  %68 = vmatprep.subr.mxu0 0.0
  %69 = vmatpush1.msra.mxu0 0.0
  %70 = vmatprep.subr.mxu0 0.0
  %71 = vmatpush1.msra.mxu0 0.0
  %72 = vmatprep.subr.mxu0 0.0
  %73 = vmatpush1.msra.mxu0 0.0
  %74 = vmatprep.subr.mxu0 0.0
  %75 = vmatpush1.msra.mxu0 0.0
  %76 = vmatprep.subr.mxu0 0.0
  %77 = vmatpush1.msra.mxu0 0.0
  %78 = vmatprep.subr.mxu0 0.0
  %79 = vmatpush1.msra.mxu0 0.0
  %80 = vmatprep.subr.mxu0 0.0
  %81 = vmatpush1.msra.mxu0 0.0
  %82 = vmatprep.subr.mxu0 0.0
  %83 = vmatpush1.msra.mxu0 0.0
  %84 = vmatprep.subr.mxu0 0.0
  %85 = vmatpush1.msra.mxu0 0.0
  %86 = vmatprep.subr.mxu0 0.0
  %87 = vmatpush1.msra.mxu0 0.0
  %88 = vmatprep.subr.mxu0 0.0
  %89 = vmatpush1.msra.mxu0 0.0
  %90 = vmatprep.subr.mxu0 0.0
  %91 = vmatpush1.msra.mxu0 0.0
  %92 = vmatprep.subr.mxu0 0.0
  %93 = vmatpush1.msra.mxu0 0.0
  %94 = vmatprep.subr.mxu0 0.0
  %95 = vmatpush1.msra.mxu0 0.0
  %96 = vmatprep.subr.mxu0 0.0
  %97 = vmatpush1.msra.mxu0 0.0
  %98 = vmatprep.subr.mxu0 0.0
  %99 = vmatpush1.msra.mxu0 0.0
  %100 = vmatprep.subr.mxu0 0.0
  %101 = vmatpush1.msra.mxu0 0.0
  %102 = vmatprep.subr.mxu0 0.0
  %103 = vmatpush1.msra.mxu0 0.0
  %104 = vmatprep.subr.mxu0 0.0
  %105 = vmatpush1.msra.mxu0 0.0
  %106 = vmatprep.subr.mxu0 0.0
  %107 = vmatpush1.msra.mxu0 0.0
  %108 = vmatprep.subr.mxu0 0.0
  %109 = vmatpush1.msra.mxu0 0.0
  %110 = vmatprep.subr.mxu0 0.0
  %111 = vmatpush1.msra.mxu0 0.0
  %112 = vmatprep.subr.mxu0 0.0
  %113 = vmatpush1.msra.mxu0 0.0
  %114 = vmatprep.subr.mxu0 0.0
  %115 = vmatpush1.msra.mxu0 0.0
  %116 = vmatprep.subr.mxu0 0.0
  %117 = vmatpush1.msra.mxu0 0.0
  %118 = vmatprep.subr.mxu0 0.0
  %119 = vmatpush1.msra.mxu0 0.0
  %120 = vmatprep.subr.mxu0 0.0
  %121 = vmatpush1.msra.mxu0 0.0
  %122 = vmatprep.mubr.f32.mxu0 0.0
  %123 = vmatmul.mubr.f32.gmra.mrb[0].mxu0 %v35
  %v124 = vpop.f32.mrb[0].mxu0
  %v125 = vadd.f32 %v31, %v124
  %v126 = vpop.f32.mrb[0].mxu0
  %127 = vmatprep.mubr.f32.mxu0 0.0
  %128 = vmatmul.mubr.f32.gmra.mrb[0].mxu0 %v38
  %v129 = vpop.f32.mrb[0].mxu0
  %v130 = vadd.f32 %v31, %v129
  %v131 = vpop.f32.mrb[0].mxu0
  %132 = vmatprep.mubr.f32.mxu0 0.0
  %133 = vmatmul.mubr.f32.gmra.mrb[0].mxu0 %v41
  %v134 = vpop.f32.mrb[0].mxu0
  %v135 = vadd.f32 %v31, %v134
  %v136 = vpop.f32.mrb[0].mxu0
  %137 = vmatprep.mubr.f32.mxu0 0.0
  %138 = vmatmul.mubr.f32.gmra.mrb[0].mxu0 %v44
  %v139 = vpop.f32.mrb[0].mxu0
  %v140 = vadd.f32 %v31, %v139
  %v141 = vpop.f32.mrb[0].mxu0
  %142 = vmatprep.mubr.f32.mxu0 0.0
  %143 = vmatmul.mubr.f32.gmra.mrb[0].mxu0 %v47
  %v144 = vpop.f32.mrb[0].mxu0
  %v145 = vadd.f32 %v31, %v144
  %v146 = vpop.f32.mrb[0].mxu0
  %147 = vmatprep.mubr.f32.mxu0 0.0
  %148 = vmatmul.mubr.f32.gmra.mrb[0].mxu0 %v50
  %v149 = vpop.f32.mrb[0].mxu0
  %v150 = vadd.f32 %v31, %v149
  %v151 = vpop.f32.mrb[0].mxu0
  %152 = vmatprep.mubr.f32.mxu0 0.0
  %153 = vmatmul.mubr.f32.gmra.mrb[0].mxu0 %v53
  %v154 = vpop.f32.mrb[0].mxu0
  %v155 = vadd.f32 %v31, %v154
  %v156 = vpop.f32.mrb[0].mxu0
  %157 = vmatprep.mubr.f32.mxu0 0.0
  %158 = vmatmul.mubr.f32.gmra.mrb[0].mxu0 %v56
  %v159 = vpop.f32.mrb[0].mxu0
  %v160 = vadd.f32 %v31, %v159
  %v161 = vpop.f32.mrb[0].mxu0
  %162 = vdwg.mxu0
  %163 = vst [vmem:[#allocation2] sm:$0xff] %v125
  %164 = vst [vmem:[#allocation2 + $0x8] sm:$0xff] %v130
  %165 = vst [vmem:[#allocation2 + $0x10] sm:$0xff] %v135
  %166 = vst [vmem:[#allocation2 + $0x18] sm:$0xff] %v140
  %167 = vst [vmem:[#allocation2 + $0x20] sm:$0xff] %v145
  %168 = vst [vmem:[#allocation2 + $0x28] sm:$0xff] %v150
  %169 = vst [vmem:[#allocation2 + $0x30] sm:$0xff] %v155
  %170 = vst [vmem:[#allocation2 + $0x38] sm:$0xff] %v160
  %v171 = vld [vmem:[%s2] sm:$0xff]
  %v172 = vld [vmem:[%s2 + $0x8] sm:$0xff]
  %v173 = vld [vmem:[%s2 + $0x10] sm:$0xff]
  %v174 = vld [vmem:[%s2 + $0x18] sm:$0xff]
  %v175 = vlaneseq
  %v176 = vand.u32 %v175, 127
  %vm177 = vcmp.ge.s32.totalorder %v176, 64
  %vm178 = vcmp.lt.s32.totalorder %v176, 96
  %vm179 = vmand %vm177, %vm178
  %v180 = vld [vmem:[#allocation2] sm:$0xff]
  %vm181 = vcmask 261120
  %v183 = vsel %vm181, 0.0, 0
  %185 = vmatprep.subr.mxu0 0.0
  %186 = vmatpush1.msra.mxu0 %v171
  %187 = vmatprep.subr.mxu0 0.0
  %188 = vmatpush1.msra.mxu0 %v172
  %189 = vmatprep.subr.mxu0 0.0
  %190 = vmatpush1.msra.mxu0 %v173
  %191 = vmatprep.subr.mxu0 0.0
  %192 = vmatpush1.msra.mxu0 %v174
  %193 = vmatprep.subr.mxu0 0.0
  %194 = vmatpush1.msra.mxu0 0.0
  %195 = vmatprep.subr.mxu0 0.0
  %196 = vmatpush1.msra.mxu0 0.0
  %197 = vmatprep.subr.mxu0 0.0
  %198 = vmatpush1.msra.mxu0 0.0
  %199 = vmatprep.subr.mxu0 0.0
  %200 = vmatpush1.msra.mxu0 0.0
  %201 = vmatprep.subr.mxu0 0.0
  %202 = vmatpush1.msra.mxu0 0.0
  %203 = vmatprep.subr.mxu0 0.0
  %204 = vmatpush1.msra.mxu0 0.0
  %205 = vmatprep.subr.mxu0 0.0
  %206 = vmatpush1.msra.mxu0 0.0
  %207 = vmatprep.subr.mxu0 0.0
  %208 = vmatpush1.msra.mxu0 0.0
  %209 = vmatprep.subr.mxu0 0.0
  %210 = vmatpush1.msra.mxu0 0.0
  %211 = vmatprep.subr.mxu0 0.0
  %212 = vmatpush1.msra.mxu0 0.0
  %213 = vmatprep.subr.mxu0 0.0
  %214 = vmatpush1.msra.mxu0 0.0
  %215 = vmatprep.subr.mxu0 0.0
  %216 = vmatpush1.msra.mxu0 0.0
  %217 = vmatprep.subr.mxu0 0.0
  %218 = vmatpush1.msra.mxu0 0.0
  %219 = vmatprep.subr.mxu0 0.0
  %220 = vmatpush1.msra.mxu0 0.0
  %221 = vmatprep.subr.mxu0 0.0
  %222 = vmatpush1.msra.mxu0 0.0
  %223 = vmatprep.subr.mxu0 0.0
  %224 = vmatpush1.msra.mxu0 0.0
  %225 = vmatprep.subr.mxu0 0.0
  %226 = vmatpush1.msra.mxu0 0.0
  %227 = vmatprep.subr.mxu0 0.0
  %228 = vmatpush1.msra.mxu0 0.0
  %229 = vmatprep.subr.mxu0 0.0
  %230 = vmatpush1.msra.mxu0 0.0
  %231 = vmatprep.subr.mxu0 0.0
  %232 = vmatpush1.msra.mxu0 0.0
  %233 = vmatprep.subr.mxu0 0.0
  %234 = vmatpush1.msra.mxu0 0.0
  %235 = vmatprep.subr.mxu0 0.0
  %236 = vmatpush1.msra.mxu0 0.0
  %237 = vmatprep.subr.mxu0 0.0
  %238 = vmatpush1.msra.mxu0 0.0
  %239 = vmatprep.subr.mxu0 0.0
  %240 = vmatpush1.msra.mxu0 0.0
  %241 = vmatprep.subr.mxu0 0.0
  %242 = vmatpush1.msra.mxu0 0.0
  %243 = vmatprep.subr.mxu0 0.0
  %244 = vmatpush1.msra.mxu0 0.0
  %245 = vmatprep.subr.mxu0 0.0
  %246 = vmatpush1.msra.mxu0 0.0
  %247 = vmatprep.subr.mxu0 0.0
  %248 = vmatpush1.msra.mxu0 0.0
  %249 = vmatprep.mubr.f32.mxu0 0.0
  %250 = vmatmul.mubr.f32.gmra.mrb[0].mxu0 %v183
  %v251 = vpop.f32.mrb[0].mxu0
  %v252 = vadd.f32 0.0, %v251
  %v253 = vpop.f32.mrb[0].mxu0
  %254 = vdwg.mxu0
  %v255 = vadd.f32 %v180, %v252
  %v256 = vxor.u32 %v255, 2147483648
  %v257 = vmul.f32 %v256, 1.442695
  %v258 = vpow.pop %v257
  %v259 = vadd.f32 %v258, 1.0
  %v260 = vrcp.pop %v259
  %v261 = vmul.f32 1.0, %v260
  %v262 = vtanh.pop %v255
  %v263 = vsel %vm179, %v262, %v261
  %v264 = vmul.f32 %v263, 0.0
  %266 = vrot.lane.b32.xlu0 %v263, 64
  %v267 = vpop.permute.xlu0 %266
  %v269 = vmul.f32 %v263, %v267
  %271 = vrot.lane.b32.xlu0 %v269, 32
  %v272 = vpop.permute.xlu0 %271
  %v274 = vadd.f32 %v264, %v272
  %v275 = vtanh.pop %v274
  %277 = vrot.lane.b32.xlu0 %v275, 64
  %v278 = vpop.permute.xlu0 %277
  %v280 = vmul.f32 %v263, %v278
  %v281 = vld [vmem:[#allocation2 + $0x8] sm:$0xff]
  %283 = vrot.lane.b32.xlu0 %v280, 32
  %v284 = vpop.permute.xlu0 %283
  %v285 = vsel %vm181, %v284, 0
  %287 = vmatprep.subr.mxu0 0.0
  %288 = vmatpush1.msra.mxu0 %v171
  %289 = vmatprep.subr.mxu0 0.0
  %290 = vmatpush1.msra.mxu0 %v172
  %291 = vmatprep.subr.mxu0 0.0
  %292 = vmatpush1.msra.mxu0 %v173
  %293 = vmatprep.subr.mxu0 0.0
  %294 = vmatpush1.msra.mxu0 %v174
  %295 = vmatprep.subr.mxu0 0.0
  %296 = vmatpush1.msra.mxu0 0.0
  %297 = vmatprep.subr.mxu0 0.0
  %298 = vmatpush1.msra.mxu0 0.0
  %299 = vmatprep.subr.mxu0 0.0
  %300 = vmatpush1.msra.mxu0 0.0
  %301 = vmatprep.subr.mxu0 0.0
  %302 = vmatpush1.msra.mxu0 0.0
  %303 = vmatprep.subr.mxu0 0.0
  %304 = vmatpush1.msra.mxu0 0.0
  %305 = vmatprep.subr.mxu0 0.0
  %306 = vmatpush1.msra.mxu0 0.0
  %307 = vmatprep.subr.mxu0 0.0
  %308 = vmatpush1.msra.mxu0 0.0
  %309 = vmatprep.subr.mxu0 0.0
  %310 = vmatpush1.msra.mxu0 0.0
  %311 = vmatprep.subr.mxu0 0.0
  %312 = vmatpush1.msra.mxu0 0.0
  %313 = vmatprep.subr.mxu0 0.0
  %314 = vmatpush1.msra.mxu0 0.0
  %315 = vmatprep.subr.mxu0 0.0
  %316 = vmatpush1.msra.mxu0 0.0
  %317 = vmatprep.subr.mxu0 0.0
  %318 = vmatpush1.msra.mxu0 0.0
  %319 = vmatprep.subr.mxu0 0.0
  %320 = vmatpush1.msra.mxu0 0.0
  %321 = vmatprep.subr.mxu0 0.0
  %322 = vmatpush1.msra.mxu0 0.0
  %323 = vmatprep.subr.mxu0 0.0
  %324 = vmatpush1.msra.mxu0 0.0
  %325 = vmatprep.subr.mxu0 0.0
  %326 = vmatpush1.msra.mxu0 0.0
  %327 = vmatprep.subr.mxu0 0.0
  %328 = vmatpush1.msra.mxu0 0.0
  %329 = vmatprep.subr.mxu0 0.0
  %330 = vmatpush1.msra.mxu0 0.0
  %331 = vmatprep.subr.mxu0 0.0
  %332 = vmatpush1.msra.mxu0 0.0
  %333 = vmatprep.subr.mxu0 0.0
  %334 = vmatpush1.msra.mxu0 0.0
  %335 = vmatprep.subr.mxu0 0.0
  %336 = vmatpush1.msra.mxu0 0.0
  %337 = vmatprep.subr.mxu0 0.0
  %338 = vmatpush1.msra.mxu0 0.0
  %339 = vmatprep.subr.mxu0 0.0
  %340 = vmatpush1.msra.mxu0 0.0
  %341 = vmatprep.subr.mxu0 0.0
  %342 = vmatpush1.msra.mxu0 0.0
  %343 = vmatprep.subr.mxu0 0.0
  %344 = vmatpush1.msra.mxu0 0.0
  %345 = vmatprep.subr.mxu0 0.0
  %346 = vmatpush1.msra.mxu0 0.0
  %347 = vmatprep.subr.mxu0 0.0
  %348 = vmatpush1.msra.mxu0 0.0
  %349 = vmatprep.subr.mxu0 0.0
  %350 = vmatpush1.msra.mxu0 0.0
  %351 = vmatprep.mubr.f32.mxu0 0.0
  %352 = vmatmul.mubr.f32.gmra.mrb[0].mxu0 %v285
  %v353 = vpop.f32.mrb[0].mxu0
  %v354 = vadd.f32 0.0, %v353
  %v355 = vpop.f32.mrb[0].mxu0
  %356 = vdwg.mxu0
  %v357 = vadd.f32 %v281, %v354
  %v358 = vxor.u32 %v357, 2147483648
  %v359 = vmul.f32 %v358, 1.442695
  %v360 = vpow.pop %v359
  %v361 = vadd.f32 %v360, 1.0
  %v362 = vrcp.pop %v361
  %v363 = vmul.f32 1.0, %v362
  %v364 = vtanh.pop %v357
  %v365 = vsel %vm179, %v364, %v363
  %v366 = vmul.f32 %v365, %v274
  %368 = vrot.lane.b32.xlu0 %v365, 64
  %v369 = vpop.permute.xlu0 %368
  %v371 = vmul.f32 %v365, %v369
  %373 = vrot.lane.b32.xlu0 %v371, 32
  %v374 = vpop.permute.xlu0 %373
  %v376 = vadd.f32 %v366, %v374
  %v377 = vtanh.pop %v376
  %379 = vrot.lane.b32.xlu0 %v377, 64
  %v380 = vpop.permute.xlu0 %379
  %v382 = vmul.f32 %v365, %v380
  %v383 = vld [vmem:[#allocation2 + $0x10] sm:$0xff]
  %385 = vrot.lane.b32.xlu0 %v382, 32
  %v386 = vpop.permute.xlu0 %385
  %v387 = vsel %vm181, %v386, 0
  %389 = vmatprep.subr.mxu0 0.0
  %390 = vmatpush1.msra.mxu0 %v171
  %391 = vmatprep.subr.mxu0 0.0
  %392 = vmatpush1.msra.mxu0 %v172
  %393 = vmatprep.subr.mxu0 0.0
  %394 = vmatpush1.msra.mxu0 %v173
  %395 = vmatprep.subr.mxu0 0.0
  %396 = vmatpush1.msra.mxu0 %v174
  %397 = vmatprep.subr.mxu0 0.0
  %398 = vmatpush1.msra.mxu0 0.0
  %399 = vmatprep.subr.mxu0 0.0
  %400 = vmatpush1.msra.mxu0 0.0
  %401 = vmatprep.subr.mxu0 0.0
  %402 = vmatpush1.msra.mxu0 0.0
  %403 = vmatprep.subr.mxu0 0.0
  %404 = vmatpush1.msra.mxu0 0.0
  %405 = vmatprep.subr.mxu0 0.0
  %406 = vmatpush1.msra.mxu0 0.0
  %407 = vmatprep.subr.mxu0 0.0
  %408 = vmatpush1.msra.mxu0 0.0
  %409 = vmatprep.subr.mxu0 0.0
  %410 = vmatpush1.msra.mxu0 0.0
  %411 = vmatprep.subr.mxu0 0.0
  %412 = vmatpush1.msra.mxu0 0.0
  %413 = vmatprep.subr.mxu0 0.0
  %414 = vmatpush1.msra.mxu0 0.0
  %415 = vmatprep.subr.mxu0 0.0
  %416 = vmatpush1.msra.mxu0 0.0
  %417 = vmatprep.subr.mxu0 0.0
  %418 = vmatpush1.msra.mxu0 0.0
  %419 = vmatprep.subr.mxu0 0.0
  %420 = vmatpush1.msra.mxu0 0.0
  %421 = vmatprep.subr.mxu0 0.0
  %422 = vmatpush1.msra.mxu0 0.0
  %423 = vmatprep.subr.mxu0 0.0
  %424 = vmatpush1.msra.mxu0 0.0
  %425 = vmatprep.subr.mxu0 0.0
  %426 = vmatpush1.msra.mxu0 0.0
  %427 = vmatprep.subr.mxu0 0.0
  %428 = vmatpush1.msra.mxu0 0.0
  %429 = vmatprep.subr.mxu0 0.0
  %430 = vmatpush1.msra.mxu0 0.0
  %431 = vmatprep.subr.mxu0 0.0
  %432 = vmatpush1.msra.mxu0 0.0
  %433 = vmatprep.subr.mxu0 0.0
  %434 = vmatpush1.msra.mxu0 0.0
  %435 = vmatprep.subr.mxu0 0.0
  %436 = vmatpush1.msra.mxu0 0.0
  %437 = vmatprep.subr.mxu0 0.0
  %438 = vmatpush1.msra.mxu0 0.0
  %439 = vmatprep.subr.mxu0 0.0
  %440 = vmatpush1.msra.mxu0 0.0
  %441 = vmatprep.subr.mxu0 0.0
  %442 = vmatpush1.msra.mxu0 0.0
  %443 = vmatprep.subr.mxu0 0.0
  %444 = vmatpush1.msra.mxu0 0.0
  %445 = vmatprep.subr.mxu0 0.0
  %446 = vmatpush1.msra.mxu0 0.0
  %447 = vmatprep.subr.mxu0 0.0
  %448 = vmatpush1.msra.mxu0 0.0
  %449 = vmatprep.subr.mxu0 0.0
  %450 = vmatpush1.msra.mxu0 0.0
  %451 = vmatprep.subr.mxu0 0.0
  %452 = vmatpush1.msra.mxu0 0.0
  %453 = vmatprep.mubr.f32.mxu0 0.0
  %454 = vmatmul.mubr.f32.gmra.mrb[0].mxu0 %v387
  %v455 = vpop.f32.mrb[0].mxu0
  %v456 = vadd.f32 0.0, %v455
  %v457 = vpop.f32.mrb[0].mxu0
  %458 = vdwg.mxu0
  %v459 = vadd.f32 %v383, %v456
  %v460 = vxor.u32 %v459, 2147483648
  %v461 = vmul.f32 %v460, 1.442695
  %v462 = vpow.pop %v461
  %v463 = vadd.f32 %v462, 1.0
  %v464 = vrcp.pop %v463
  %v465 = vmul.f32 1.0, %v464
  %v466 = vtanh.pop %v459
  %v467 = vsel %vm179, %v466, %v465
  %v468 = vmul.f32 %v467, %v376
  %470 = vrot.lane.b32.xlu0 %v467, 64
  %v471 = vpop.permute.xlu0 %470
  %v473 = vmul.f32 %v467, %v471
  %475 = vrot.lane.b32.xlu0 %v473, 32
  %v476 = vpop.permute.xlu0 %475
  %v478 = vadd.f32 %v468, %v476
  %v479 = vtanh.pop %v478
  %481 = vrot.lane.b32.xlu0 %v479, 64
  %v482 = vpop.permute.xlu0 %481
  %v484 = vmul.f32 %v467, %v482
  %v485 = vld [vmem:[#allocation2 + $0x18] sm:$0xff]
  %487 = vrot.lane.b32.xlu0 %v484, 32
  %v488 = vpop.permute.xlu0 %487
  %v489 = vsel %vm181, %v488, 0
  %491 = vmatprep.subr.mxu0 0.0
  %492 = vmatpush1.msra.mxu0 %v171
  %493 = vmatprep.subr.mxu0 0.0
  %494 = vmatpush1.msra.mxu0 %v172
  %495 = vmatprep.subr.mxu0 0.0
  %496 = vmatpush1.msra.mxu0 %v173
  %497 = vmatprep.subr.mxu0 0.0
  %498 = vmatpush1.msra.mxu0 %v174
  %499 = vmatprep.subr.mxu0 0.0
  %500 = vmatpush1.msra.mxu0 0.0
  %501 = vmatprep.subr.mxu0 0.0
  %502 = vmatpush1.msra.mxu0 0.0
  %503 = vmatprep.subr.mxu0 0.0
  %504 = vmatpush1.msra.mxu0 0.0
  %505 = vmatprep.subr.mxu0 0.0
  %506 = vmatpush1.msra.mxu0 0.0
  %507 = vmatprep.subr.mxu0 0.0
  %508 = vmatpush1.msra.mxu0 0.0
  %509 = vmatprep.subr.mxu0 0.0
  %510 = vmatpush1.msra.mxu0 0.0
  %511 = vmatprep.subr.mxu0 0.0
  %512 = vmatpush1.msra.mxu0 0.0
  %513 = vmatprep.subr.mxu0 0.0
  %514 = vmatpush1.msra.mxu0 0.0
  %515 = vmatprep.subr.mxu0 0.0
  %516 = vmatpush1.msra.mxu0 0.0
  %517 = vmatprep.subr.mxu0 0.0
  %518 = vmatpush1.msra.mxu0 0.0
  %519 = vmatprep.subr.mxu0 0.0
  %520 = vmatpush1.msra.mxu0 0.0
  %521 = vmatprep.subr.mxu0 0.0
  %522 = vmatpush1.msra.mxu0 0.0
  %523 = vmatprep.subr.mxu0 0.0
  %524 = vmatpush1.msra.mxu0 0.0
  %525 = vmatprep.subr.mxu0 0.0
  %526 = vmatpush1.msra.mxu0 0.0
  %527 = vmatprep.subr.mxu0 0.0
  %528 = vmatpush1.msra.mxu0 0.0
  %529 = vmatprep.subr.mxu0 0.0
  %530 = vmatpush1.msra.mxu0 0.0
  %531 = vmatprep.subr.mxu0 0.0
  %532 = vmatpush1.msra.mxu0 0.0
  %533 = vmatprep.subr.mxu0 0.0
  %534 = vmatpush1.msra.mxu0 0.0
  %535 = vmatprep.subr.mxu0 0.0
  %536 = vmatpush1.msra.mxu0 0.0
  %537 = vmatprep.subr.mxu0 0.0
  %538 = vmatpush1.msra.mxu0 0.0
  %539 = vmatprep.subr.mxu0 0.0
  %540 = vmatpush1.msra.mxu0 0.0
  %541 = vmatprep.subr.mxu0 0.0
  %542 = vmatpush1.msra.mxu0 0.0
  %543 = vmatprep.subr.mxu0 0.0
  %544 = vmatpush1.msra.mxu0 0.0
  %545 = vmatprep.subr.mxu0 0.0
  %546 = vmatpush1.msra.mxu0 0.0
  %547 = vmatprep.subr.mxu0 0.0
  %548 = vmatpush1.msra.mxu0 0.0
  %549 = vmatprep.subr.mxu0 0.0
  %550 = vmatpush1.msra.mxu0 0.0
  %551 = vmatprep.subr.mxu0 0.0
  %552 = vmatpush1.msra.mxu0 0.0
  %553 = vmatprep.subr.mxu0 0.0
  %554 = vmatpush1.msra.mxu0 0.0
  %555 = vmatprep.mubr.f32.mxu0 0.0
  %556 = vmatmul.mubr.f32.gmra.mrb[0].mxu0 %v489
  %v557 = vpop.f32.mrb[0].mxu0
  %v558 = vadd.f32 0.0, %v557
  %v559 = vpop.f32.mrb[0].mxu0
  %560 = vdwg.mxu0
  %v561 = vadd.f32 %v485, %v558
  %v562 = vxor.u32 %v561, 2147483648
  %v563 = vmul.f32 %v562, 1.442695
  %v564 = vpow.pop %v563
  %v565 = vadd.f32 %v564, 1.0
  %v566 = vrcp.pop %v565
  %v567 = vmul.f32 1.0, %v566
  %v568 = vtanh.pop %v561
  %v569 = vsel %vm179, %v568, %v567
  %v570 = vmul.f32 %v569, %v478
  %572 = vrot.lane.b32.xlu0 %v569, 64
  %v573 = vpop.permute.xlu0 %572
  %v575 = vmul.f32 %v569, %v573
  %577 = vrot.lane.b32.xlu0 %v575, 32
  %v578 = vpop.permute.xlu0 %577
  %v580 = vadd.f32 %v570, %v578
  %v581 = vtanh.pop %v580
  %583 = vrot.lane.b32.xlu0 %v581, 64
  %v584 = vpop.permute.xlu0 %583
  %v586 = vmul.f32 %v569, %v584
  %v587 = vld [vmem:[#allocation2 + $0x20] sm:$0xff]
  %589 = vrot.lane.b32.xlu0 %v586, 32
  %v590 = vpop.permute.xlu0 %589
  %v591 = vsel %vm181, %v590, 0
  %593 = vmatprep.subr.mxu0 0.0
  %594 = vmatpush1.msra.mxu0 %v171
  %595 = vmatprep.subr.mxu0 0.0
  %596 = vmatpush1.msra.mxu0 %v172
  %597 = vmatprep.subr.mxu0 0.0
  %598 = vmatpush1.msra.mxu0 %v173
  %599 = vmatprep.subr.mxu0 0.0
  %600 = vmatpush1.msra.mxu0 %v174
  %601 = vmatprep.subr.mxu0 0.0
  %602 = vmatpush1.msra.mxu0 0.0
  %603 = vmatprep.subr.mxu0 0.0
  %604 = vmatpush1.msra.mxu0 0.0
  %605 = vmatprep.subr.mxu0 0.0
  %606 = vmatpush1.msra.mxu0 0.0
  %607 = vmatprep.subr.mxu0 0.0
  %608 = vmatpush1.msra.mxu0 0.0
  %609 = vmatprep.subr.mxu0 0.0
  %610 = vmatpush1.msra.mxu0 0.0
  %611 = vmatprep.subr.mxu0 0.0
  %612 = vmatpush1.msra.mxu0 0.0
  %613 = vmatprep.subr.mxu0 0.0
  %614 = vmatpush1.msra.mxu0 0.0
  %615 = vmatprep.subr.mxu0 0.0
  %616 = vmatpush1.msra.mxu0 0.0
  %617 = vmatprep.subr.mxu0 0.0
  %618 = vmatpush1.msra.mxu0 0.0
  %619 = vmatprep.subr.mxu0 0.0
  %620 = vmatpush1.msra.mxu0 0.0
  %621 = vmatprep.subr.mxu0 0.0
  %622 = vmatpush1.msra.mxu0 0.0
  %623 = vmatprep.subr.mxu0 0.0
  %624 = vmatpush1.msra.mxu0 0.0
  %625 = vmatprep.subr.mxu0 0.0
  %626 = vmatpush1.msra.mxu0 0.0
  %627 = vmatprep.subr.mxu0 0.0
  %628 = vmatpush1.msra.mxu0 0.0
  %629 = vmatprep.subr.mxu0 0.0
  %630 = vmatpush1.msra.mxu0 0.0
  %631 = vmatprep.subr.mxu0 0.0
  %632 = vmatpush1.msra.mxu0 0.0
  %633 = vmatprep.subr.mxu0 0.0
  %634 = vmatpush1.msra.mxu0 0.0
  %635 = vmatprep.subr.mxu0 0.0
  %636 = vmatpush1.msra.mxu0 0.0
  %637 = vmatprep.subr.mxu0 0.0
  %638 = vmatpush1.msra.mxu0 0.0
  %639 = vmatprep.subr.mxu0 0.0
  %640 = vmatpush1.msra.mxu0 0.0
  %641 = vmatprep.subr.mxu0 0.0
  %642 = vmatpush1.msra.mxu0 0.0
  %643 = vmatprep.subr.mxu0 0.0
  %644 = vmatpush1.msra.mxu0 0.0
  %645 = vmatprep.subr.mxu0 0.0
  %646 = vmatpush1.msra.mxu0 0.0
  %647 = vmatprep.subr.mxu0 0.0
  %648 = vmatpush1.msra.mxu0 0.0
  %649 = vmatprep.subr.mxu0 0.0
  %650 = vmatpush1.msra.mxu0 0.0
  %651 = vmatprep.subr.mxu0 0.0
  %652 = vmatpush1.msra.mxu0 0.0
  %653 = vmatprep.subr.mxu0 0.0
  %654 = vmatpush1.msra.mxu0 0.0
  %655 = vmatprep.subr.mxu0 0.0
  %656 = vmatpush1.msra.mxu0 0.0
  %657 = vmatprep.mubr.f32.mxu0 0.0
  %658 = vmatmul.mubr.f32.gmra.mrb[0].mxu0 %v591
  %v659 = vpop.f32.mrb[0].mxu0
  %v660 = vadd.f32 0.0, %v659
  %v661 = vpop.f32.mrb[0].mxu0
  %662 = vdwg.mxu0
  %v663 = vadd.f32 %v587, %v660
  %v664 = vxor.u32 %v663, 2147483648
  %v665 = vmul.f32 %v664, 1.442695
  %v666 = vpow.pop %v665
  %v667 = vadd.f32 %v666, 1.0
  %v668 = vrcp.pop %v667
  %v669 = vmul.f32 1.0, %v668
  %v670 = vtanh.pop %v663
  %v671 = vsel %vm179, %v670, %v669
  %v672 = vmul.f32 %v671, %v580
  %674 = vrot.lane.b32.xlu0 %v671, 64
  %v675 = vpop.permute.xlu0 %674
  %v677 = vmul.f32 %v671, %v675
  %679 = vrot.lane.b32.xlu0 %v677, 32
  %v680 = vpop.permute.xlu0 %679
  %v682 = vadd.f32 %v672, %v680
  %v683 = vtanh.pop %v682
  %685 = vrot.lane.b32.xlu0 %v683, 64
  %v686 = vpop.permute.xlu0 %685
  %v688 = vmul.f32 %v671, %v686
  %v689 = vld [vmem:[#allocation2 + $0x28] sm:$0xff]
  %691 = vrot.lane.b32.xlu0 %v688, 32
  %v692 = vpop.permute.xlu0 %691
  %v693 = vsel %vm181, %v692, 0
  %695 = vmatprep.subr.mxu0 0.0
  %696 = vmatpush1.msra.mxu0 %v171
  %697 = vmatprep.subr.mxu0 0.0
  %698 = vmatpush1.msra.mxu0 %v172
  %699 = vmatprep.subr.mxu0 0.0
  %700 = vmatpush1.msra.mxu0 %v173
  %701 = vmatprep.subr.mxu0 0.0
  %702 = vmatpush1.msra.mxu0 %v174
  %703 = vmatprep.subr.mxu0 0.0
  %704 = vmatpush1.msra.mxu0 0.0
  %705 = vmatprep.subr.mxu0 0.0
  %706 = vmatpush1.msra.mxu0 0.0
  %707 = vmatprep.subr.mxu0 0.0
  %708 = vmatpush1.msra.mxu0 0.0
  %709 = vmatprep.subr.mxu0 0.0
  %710 = vmatpush1.msra.mxu0 0.0
  %711 = vmatprep.subr.mxu0 0.0
  %712 = vmatpush1.msra.mxu0 0.0
  %713 = vmatprep.subr.mxu0 0.0
  %714 = vmatpush1.msra.mxu0 0.0
  %715 = vmatprep.subr.mxu0 0.0
  %716 = vmatpush1.msra.mxu0 0.0
  %717 = vmatprep.subr.mxu0 0.0
  %718 = vmatpush1.msra.mxu0 0.0
  %719 = vmatprep.subr.mxu0 0.0
  %720 = vmatpush1.msra.mxu0 0.0
  %721 = vmatprep.subr.mxu0 0.0
  %722 = vmatpush1.msra.mxu0 0.0
  %723 = vmatprep.subr.mxu0 0.0
  %724 = vmatpush1.msra.mxu0 0.0
  %725 = vmatprep.subr.mxu0 0.0
  %726 = vmatpush1.msra.mxu0 0.0
  %727 = vmatprep.subr.mxu0 0.0
  %728 = vmatpush1.msra.mxu0 0.0
  %729 = vmatprep.subr.mxu0 0.0
  %730 = vmatpush1.msra.mxu0 0.0
  %731 = vmatprep.subr.mxu0 0.0
  %732 = vmatpush1.msra.mxu0 0.0
  %733 = vmatprep.subr.mxu0 0.0
  %734 = vmatpush1.msra.mxu0 0.0
  %735 = vmatprep.subr.mxu0 0.0
  %736 = vmatpush1.msra.mxu0 0.0
  %737 = vmatprep.subr.mxu0 0.0
  %738 = vmatpush1.msra.mxu0 0.0
  %739 = vmatprep.subr.mxu0 0.0
  %740 = vmatpush1.msra.mxu0 0.0
  %741 = vmatprep.subr.mxu0 0.0
  %742 = vmatpush1.msra.mxu0 0.0
  %743 = vmatprep.subr.mxu0 0.0
  %744 = vmatpush1.msra.mxu0 0.0
  %745 = vmatprep.subr.mxu0 0.0
  %746 = vmatpush1.msra.mxu0 0.0
  %747 = vmatprep.subr.mxu0 0.0
  %748 = vmatpush1.msra.mxu0 0.0
  %749 = vmatprep.subr.mxu0 0.0
  %750 = vmatpush1.msra.mxu0 0.0
  %751 = vmatprep.subr.mxu0 0.0
  %752 = vmatpush1.msra.mxu0 0.0
  %753 = vmatprep.subr.mxu0 0.0
  %754 = vmatpush1.msra.mxu0 0.0
  %755 = vmatprep.subr.mxu0 0.0
  %756 = vmatpush1.msra.mxu0 0.0
  %757 = vmatprep.subr.mxu0 0.0
  %758 = vmatpush1.msra.mxu0 0.0
  %759 = vmatprep.mubr.f32.mxu0 0.0
  %760 = vmatmul.mubr.f32.gmra.mrb[0].mxu0 %v693
  %v761 = vpop.f32.mrb[0].mxu0
  %v762 = vadd.f32 0.0, %v761
  %v763 = vpop.f32.mrb[0].mxu0
  %764 = vdwg.mxu0
  %v765 = vadd.f32 %v689, %v762
  %v766 = vxor.u32 %v765, 2147483648
  %v767 = vmul.f32 %v766, 1.442695
  %v768 = vpow.pop %v767
  %v769 = vadd.f32 %v768, 1.0
  %v770 = vrcp.pop %v769
  %v771 = vmul.f32 1.0, %v770
  %v772 = vtanh.pop %v765
  %v773 = vsel %vm179, %v772, %v771
  %v774 = vmul.f32 %v773, %v682
  %776 = vrot.lane.b32.xlu0 %v773, 64
  %v777 = vpop.permute.xlu0 %776
  %v779 = vmul.f32 %v773, %v777
  %781 = vrot.lane.b32.xlu0 %v779, 32
  %v782 = vpop.permute.xlu0 %781
  %v784 = vadd.f32 %v774, %v782
  %v785 = vtanh.pop %v784
  %787 = vrot.lane.b32.xlu0 %v785, 64
  %v788 = vpop.permute.xlu0 %787
  %v790 = vmul.f32 %v773, %v788
  %v791 = vld [vmem:[#allocation2 + $0x30] sm:$0xff]
  %793 = vrot.lane.b32.xlu0 %v790, 32
  %v794 = vpop.permute.xlu0 %793
  %v795 = vsel %vm181, %v794, 0
  %797 = vmatprep.subr.mxu0 0.0
  %798 = vmatpush1.msra.mxu0 %v171
  %799 = vmatprep.subr.mxu0 0.0
  %800 = vmatpush1.msra.mxu0 %v172
  %801 = vmatprep.subr.mxu0 0.0
  %802 = vmatpush1.msra.mxu0 %v173
  %803 = vmatprep.subr.mxu0 0.0
  %804 = vmatpush1.msra.mxu0 %v174
  %805 = vmatprep.subr.mxu0 0.0
  %806 = vmatpush1.msra.mxu0 0.0
  %807 = vmatprep.subr.mxu0 0.0
  %808 = vmatpush1.msra.mxu0 0.0
  %809 = vmatprep.subr.mxu0 0.0
  %810 = vmatpush1.msra.mxu0 0.0
  %811 = vmatprep.subr.mxu0 0.0
  %812 = vmatpush1.msra.mxu0 0.0
  %813 = vmatprep.subr.mxu0 0.0
  %814 = vmatpush1.msra.mxu0 0.0
  %815 = vmatprep.subr.mxu0 0.0
  %816 = vmatpush1.msra.mxu0 0.0
  %817 = vmatprep.subr.mxu0 0.0
  %818 = vmatpush1.msra.mxu0 0.0
  %819 = vmatprep.subr.mxu0 0.0
  %820 = vmatpush1.msra.mxu0 0.0
  %821 = vmatprep.subr.mxu0 0.0
  %822 = vmatpush1.msra.mxu0 0.0
  %823 = vmatprep.subr.mxu0 0.0
  %824 = vmatpush1.msra.mxu0 0.0
  %825 = vmatprep.subr.mxu0 0.0
  %826 = vmatpush1.msra.mxu0 0.0
  %827 = vmatprep.subr.mxu0 0.0
  %828 = vmatpush1.msra.mxu0 0.0
  %829 = vmatprep.subr.mxu0 0.0
  %830 = vmatpush1.msra.mxu0 0.0
  %831 = vmatprep.subr.mxu0 0.0
  %832 = vmatpush1.msra.mxu0 0.0
  %833 = vmatprep.subr.mxu0 0.0
  %834 = vmatpush1.msra.mxu0 0.0
  %835 = vmatprep.subr.mxu0 0.0
  %836 = vmatpush1.msra.mxu0 0.0
  %837 = vmatprep.subr.mxu0 0.0
  %838 = vmatpush1.msra.mxu0 0.0
  %839 = vmatprep.subr.mxu0 0.0
  %840 = vmatpush1.msra.mxu0 0.0
  %841 = vmatprep.subr.mxu0 0.0
  %842 = vmatpush1.msra.mxu0 0.0
  %843 = vmatprep.subr.mxu0 0.0
  %844 = vmatpush1.msra.mxu0 0.0
  %845 = vmatprep.subr.mxu0 0.0
  %846 = vmatpush1.msra.mxu0 0.0
  %847 = vmatprep.subr.mxu0 0.0
  %848 = vmatpush1.msra.mxu0 0.0
  %849 = vmatprep.subr.mxu0 0.0
  %850 = vmatpush1.msra.mxu0 0.0
  %851 = vmatprep.subr.mxu0 0.0
  %852 = vmatpush1.msra.mxu0 0.0
  %853 = vmatprep.subr.mxu0 0.0
  %854 = vmatpush1.msra.mxu0 0.0
  %855 = vmatprep.subr.mxu0 0.0
  %856 = vmatpush1.msra.mxu0 0.0
  %857 = vmatprep.subr.mxu0 0.0
  %858 = vmatpush1.msra.mxu0 0.0
  %859 = vmatprep.subr.mxu0 0.0
  %860 = vmatpush1.msra.mxu0 0.0
  %861 = vmatprep.mubr.f32.mxu0 0.0
  %862 = vmatmul.mubr.f32.gmra.mrb[0].mxu0 %v795
  %v863 = vpop.f32.mrb[0].mxu0
  %v864 = vadd.f32 0.0, %v863
  %v865 = vpop.f32.mrb[0].mxu0
  %866 = vdwg.mxu0
  %v867 = vadd.f32 %v791, %v864
  %v868 = vxor.u32 %v867, 2147483648
  %v869 = vmul.f32 %v868, 1.442695
  %v870 = vpow.pop %v869
  %v871 = vadd.f32 %v870, 1.0
  %v872 = vrcp.pop %v871
  %v873 = vmul.f32 1.0, %v872
  %v874 = vtanh.pop %v867
  %v875 = vsel %vm179, %v874, %v873
  %v876 = vmul.f32 %v875, %v784
  %878 = vrot.lane.b32.xlu0 %v875, 64
  %v879 = vpop.permute.xlu0 %878
  %v881 = vmul.f32 %v875, %v879
  %883 = vrot.lane.b32.xlu0 %v881, 32
  %v884 = vpop.permute.xlu0 %883
  %v886 = vadd.f32 %v876, %v884
  %v887 = vtanh.pop %v886
  %889 = vrot.lane.b32.xlu0 %v887, 64
  %v890 = vpop.permute.xlu0 %889
  %v892 = vmul.f32 %v875, %v890
  %v893 = vld [vmem:[#allocation2 + $0x38] sm:$0xff]
  %895 = vrot.lane.b32.xlu0 %v892, 32
  %v896 = vpop.permute.xlu0 %895
  %v897 = vsel %vm181, %v896, 0
  %899 = vmatprep.subr.mxu0 0.0
  %900 = vmatpush1.msra.mxu0 %v171
  %901 = vmatprep.subr.mxu0 0.0
  %902 = vmatpush1.msra.mxu0 %v172
  %903 = vmatprep.subr.mxu0 0.0
  %904 = vmatpush1.msra.mxu0 %v173
  %905 = vmatprep.subr.mxu0 0.0
  %906 = vmatpush1.msra.mxu0 %v174
  %907 = vmatprep.subr.mxu0 0.0
  %908 = vmatpush1.msra.mxu0 0.0
  %909 = vmatprep.subr.mxu0 0.0
  %910 = vmatpush1.msra.mxu0 0.0
  %911 = vmatprep.subr.mxu0 0.0
  %912 = vmatpush1.msra.mxu0 0.0
  %913 = vmatprep.subr.mxu0 0.0
  %914 = vmatpush1.msra.mxu0 0.0
  %915 = vmatprep.subr.mxu0 0.0
  %916 = vmatpush1.msra.mxu0 0.0
  %917 = vmatprep.subr.mxu0 0.0
  %918 = vmatpush1.msra.mxu0 0.0
  %919 = vmatprep.subr.mxu0 0.0
  %920 = vmatpush1.msra.mxu0 0.0
  %921 = vmatprep.subr.mxu0 0.0
  %922 = vmatpush1.msra.mxu0 0.0
  %923 = vmatprep.subr.mxu0 0.0
  %924 = vmatpush1.msra.mxu0 0.0
  %925 = vmatprep.subr.mxu0 0.0
  %926 = vmatpush1.msra.mxu0 0.0
  %927 = vmatprep.subr.mxu0 0.0
  %928 = vmatpush1.msra.mxu0 0.0
  %929 = vmatprep.subr.mxu0 0.0
  %930 = vmatpush1.msra.mxu0 0.0
  %931 = vmatprep.subr.mxu0 0.0
  %932 = vmatpush1.msra.mxu0 0.0
  %933 = vmatprep.subr.mxu0 0.0
  %934 = vmatpush1.msra.mxu0 0.0
  %935 = vmatprep.subr.mxu0 0.0
  %936 = vmatpush1.msra.mxu0 0.0
  %937 = vmatprep.subr.mxu0 0.0
  %938 = vmatpush1.msra.mxu0 0.0
  %939 = vmatprep.subr.mxu0 0.0
  %940 = vmatpush1.msra.mxu0 0.0
  %941 = vmatprep.subr.mxu0 0.0
  %942 = vmatpush1.msra.mxu0 0.0
  %943 = vmatprep.subr.mxu0 0.0
  %944 = vmatpush1.msra.mxu0 0.0
  %945 = vmatprep.subr.mxu0 0.0
  %946 = vmatpush1.msra.mxu0 0.0
  %947 = vmatprep.subr.mxu0 0.0
  %948 = vmatpush1.msra.mxu0 0.0
  %949 = vmatprep.subr.mxu0 0.0
  %950 = vmatpush1.msra.mxu0 0.0
  %951 = vmatprep.subr.mxu0 0.0
  %952 = vmatpush1.msra.mxu0 0.0
  %953 = vmatprep.subr.mxu0 0.0
  %954 = vmatpush1.msra.mxu0 0.0
  %955 = vmatprep.subr.mxu0 0.0
  %956 = vmatpush1.msra.mxu0 0.0
  %957 = vmatprep.subr.mxu0 0.0
  %958 = vmatpush1.msra.mxu0 0.0
  %959 = vmatprep.subr.mxu0 0.0
  %960 = vmatpush1.msra.mxu0 0.0
  %961 = vmatprep.subr.mxu0 0.0
  %962 = vmatpush1.msra.mxu0 0.0
  %963 = vmatprep.mubr.f32.mxu0 0.0
  %964 = vmatmul.mubr.f32.gmra.mrb[0].mxu0 %v897
  %v965 = vpop.f32.mrb[0].mxu0
  %v966 = vadd.f32 0.0, %v965
  %v967 = vpop.f32.mrb[0].mxu0
  %968 = vdwg.mxu0
  %v969 = vadd.f32 %v893, %v966
  %v970 = vxor.u32 %v969, 2147483648
  %v971 = vmul.f32 %v970, 1.442695
  %v972 = vpow.pop %v971
  %v973 = vadd.f32 %v972, 1.0
  %v974 = vrcp.pop %v973
  %v975 = vmul.f32 1.0, %v974
  %v976 = vtanh.pop %v969
  %v977 = vsel %vm179, %v976, %v975
  %v978 = vmul.f32 %v977, %v886
  %980 = vrot.lane.b32.xlu0 %v977, 64
  %v981 = vpop.permute.xlu0 %980
  %v983 = vmul.f32 %v977, %v981
  %985 = vrot.lane.b32.xlu0 %v983, 32
  %v986 = vpop.permute.xlu0 %985
  %v988 = vadd.f32 %v978, %v986
  %v989 = vtanh.pop %v988
  %991 = vrot.lane.b32.xlu0 %v989, 64
  %v992 = vpop.permute.xlu0 %991
  %v994 = vmul.f32 %v977, %v992
  %996 = vrot.lane.b32.xlu0 %v994, 32
  %v997 = vpop.permute.xlu0 %996
  %999 = vst.msk [vmem:[%s4] sm:$0xff] %vm181, %v997
  // Predicated region
  $region18: #{lstm1_forward.1} parent=0 // pred_check
    _
  $region19: #{lstm1_forward.1} parent=0 // pred_check_branch
    %1001 = sbr.rel (0) target = $region21
  $region20: #{lstm1_forward.1} parent=0 // pred_region
    _
  $region21: #{lstm1_forward.1} parent=0 // pred_fallthru
    _
  // Predicated region
  $region22: #{lstm1_forward.1} parent=0 // pred_check
    _
  $region23: #{lstm1_forward.1} parent=0 // pred_check_branch
    %1003 = sbr.rel (0) target = $region25
  $region24: #{lstm1_forward.1} parent=0 // pred_region
    _
  $region25: #{lstm1_forward.1} parent=0 // pred_fallthru
    _

</llo_original>
